<compile_context>
chip_gen: v7x
topology: tpu7x:2x2x1
jax: 0.10.0
libtpu: 0.0.40
codegen_flags: <defaults>
</compile_context>

<pallas_src>
import functools

import jax
import jax.numpy as jnp
import numpy as np
from jax.experimental import pallas as pl
from jax.experimental.pallas import tpu as pltpu


def _dro_body(packed, A, N):
    """Scalar DRO loss from a packed (2A + N, K) f32 tile.

    Row layout of `packed`:
      rows [0, A)        -> abnormal_outputs
      rows [A, 2A)       -> p_values
      rows [2A, 2A + N)  -> normal_outputs
    """
    abn = packed[0:A, :]                     # (A, K)
    p = packed[A:2 * A, :]                   # (A, K)
    nrm = packed[2 * A:2 * A + N, :]         # (N, K)

    # Weighted abnormal score per bag: VPU multiply + XLU lane reduce -> (A, 1).
    w_col = jnp.sum(p * abn, axis=1, keepdims=True)
    # Max normal score per bag: XLU lane reduce -> (N, 1).
    m_col = jnp.max(nrm, axis=1, keepdims=True)
    # One single-vreg XLU transpose makes w lane-dense for the hinge.
    w_row = w_col.T                                          # (1, A)
    # Hinge over every (normal, abnormal) pair: pure VPU broadcast.
    d = jnp.maximum(1.0 - w_row + m_col, 0.0)                # (N, A)
    return jnp.sum(d) * (1.0 / float(N * A))


# ----------------------------- single problem ------------------------------


def _dro_loss_kernel(packed_ref, o_ref, *, A, N):
    # Scalar result straight to SMEM (no masked VMEM store in the epilogue).
    o_ref[0, 0] = _dro_body(packed_ref[...], A, N)


@jax.jit
def _dro_loss_call(abn, nrm, p):
    A, K = abn.shape
    N = nrm.shape[0]
    # Pack the three sub-KB operands into one contiguous block -> one DMA.
    packed = jnp.concatenate([abn, p, nrm], axis=0)          # (2A + N, K)
    out = pl.pallas_call(
        functools.partial(_dro_loss_kernel, A=A, N=N),
        out_shape=jax.ShapeDtypeStruct((1, 1), jnp.float32),
        in_specs=[pl.BlockSpec(memory_space=pltpu.MemorySpace.VMEM)],
        out_specs=pl.BlockSpec(memory_space=pltpu.MemorySpace.SMEM),
        cost_estimate=pl.CostEstimate(
            flops=3 * A * K + N * K + 4 * N * A,
            transcendentals=0,
            bytes_accessed=(2 * A * K + N * K) * 4 + 4),
    )(packed)
    return out[0, 0]


# --------------------------- batched / gridded ------------------------------


def _dro_loss_batched_kernel(packed_ref, o_ref, *, A, N):
    # packed_ref: (2A + N, K) for this grid step (leading batch dim squeezed).
    loss = _dro_body(packed_ref[...], A, N)
    # Unmasked lane-dense (8, 128) store; wrapper reads element [0, 0].
    o_ref[...] = jnp.full(o_ref.shape, loss, jnp.float32)


@jax.jit
def _dro_loss_batched_call(abn, nrm, p):
    B, A, K = abn.shape
    N = nrm.shape[1]
    R = 2 * A + N
    packed = jnp.concatenate([abn, p, nrm], axis=1)          # (B, R, K)
    out = pl.pallas_call(
        functools.partial(_dro_loss_batched_kernel, A=A, N=N),
        out_shape=jax.ShapeDtypeStruct((B, 8, 128), jnp.float32),
        grid_spec=pltpu.PrefetchScalarGridSpec(
            num_scalar_prefetch=0,
            grid=(B,),
            in_specs=[pl.BlockSpec((None, R, K), lambda b: (b, 0, 0))],
            out_specs=pl.BlockSpec((None, 8, 128), lambda b: (b, 0, 0)),
        ),
        compiler_params=pltpu.CompilerParams(
            dimension_semantics=("parallel",)),
        cost_estimate=pl.CostEstimate(
            flops=B * (3 * A * K + N * K + 4 * N * A),
            transcendentals=0,
            bytes_accessed=B * (R * K + 8 * 128) * 4),
    )(packed)
    return out[:, 0, 0]


# ------------------------------- public API ---------------------------------


def dro_loss(abnormal_outputs, normal_outputs, p_values, gamma=1.0):
    """abnormal_outputs: (A, K), normal_outputs: (N, K), p_values: (A, K) -> scalar f32 loss."""
    del gamma  # stored by the module but never used in its forward pass
    # TODO(synk): fuse the upstream softmax that produces p_values into this
    # pallas_call so p_values never round-trips through HBM.
    return _dro_loss_call(
        jnp.asarray(abnormal_outputs, jnp.float32),
        jnp.asarray(normal_outputs, jnp.float32),
        jnp.asarray(p_values, jnp.float32),
    )


def dro_loss_batched(abnormal_outputs, normal_outputs, p_values, gamma=1.0):
    """B independent problems: (B, A, K), (B, N, K), (B, A, K) -> (B,) losses.

    Amortizes launch + DMA latency over the batch; batch axis is "parallel"
    so v7x shards grid steps across both TensorCores.
    """
    del gamma
    # TODO(synk): for very large A/N/K per problem, switch to a K-reduction
    # grid with VMEM accumulators and A_tile % 128 == 0 hinge tiles, sized
    # against 64 MiB VMEM on v7x (16 MiB default scoped VMEM on v5e).
    return _dro_loss_batched_call(
        jnp.asarray(abnormal_outputs, jnp.float32),
        jnp.asarray(normal_outputs, jnp.float32),
        jnp.asarray(p_values, jnp.float32),
    )


def dro_loss_ref(abnormal_outputs, normal_outputs, p_values):
    """Pure-JAX reference mirroring the PyTorch loops exactly."""
    w = jnp.sum(p_values * abnormal_outputs, axis=1)        # (A,)
    m = jnp.max(normal_outputs, axis=1)                     # (N,)
    d = jnp.maximum(1.0 - w[None, :] + m[:, None], 0.0)     # (N, A)
    return jnp.sum(d) / (normal_outputs.shape[0] * abnormal_outputs.shape[0])


if __name__ == "__main__":
    # A = 8 abnormal bags, N = 6 normal bags, K = 16 instance scores per bag.
    A, N, K = 8, 6, 16
    key = jax.random.PRNGKey(0)
    k_abn, k_nrm, k_p, k_babn, k_bnrm, k_bp = jax.random.split(key, 6)

    abnormal_outputs = jax.random.normal(k_abn, (A, K), dtype=jnp.float32)
    normal_outputs = jax.random.normal(k_nrm, (N, K), dtype=jnp.float32)
    # p_values are per-bag DRO weights over instances -> softmax.
    p_values = jax.nn.softmax(
        jax.random.normal(k_p, (A, K), dtype=jnp.float32), axis=-1)

    loss = dro_loss(abnormal_outputs, normal_outputs, p_values, gamma=1.0)
    jax.block_until_ready(loss)
    loss_ref = dro_loss_ref(abnormal_outputs, normal_outputs, p_values)
    np.testing.assert_allclose(np.asarray(loss), np.asarray(loss_ref),
                               rtol=1e-5, atol=1e-5)

    # Batched / gridded variant: B independent DROLoss forwards per pallas_call.
    B = 16
    abn_b = jax.random.normal(k_babn, (B, A, K), dtype=jnp.float32)
    nrm_b = jax.random.normal(k_bnrm, (B, N, K), dtype=jnp.float32)
    p_b = jax.nn.softmax(
        jax.random.normal(k_bp, (B, A, K), dtype=jnp.float32), axis=-1)

    losses = dro_loss_batched(abn_b, nrm_b, p_b, gamma=1.0)
    jax.block_until_ready(losses)
    losses_ref = jax.vmap(dro_loss_ref)(abn_b, nrm_b, p_b)
    np.testing.assert_allclose(np.asarray(losses), np.asarray(losses_ref),
                               rtol=1e-5, atol=1e-5)

    print("KERNEL_OK")
</pallas_src>

<mosaic_0001>
module attributes {stable_mosaic.version = 11 : i64} {
  func.func @_dro_loss_kernel(%arg0: memref<22x16xf32, #tpu.memory_space<vmem>>, %arg1: memref<1x1xf32, #tpu.memory_space<smem>>) attributes {dimension_semantics = [], scalar_prefetch = 0 : i64, scratch_operands = 0 : i64, tpu.core_type = #tpu.core_type<tc>} {
    %c0 = arith.constant 0 : index
    %c0_0 = arith.constant 0 : index
    %0 = vector.load %arg0[%c0, %c0_0] : memref<22x16xf32, #tpu.memory_space<vmem>>, vector<22x16xf32>
    %1 = vector.extract_strided_slice %0 {offsets = [0, 0], sizes = [8, 16], strides = [1, 1]} : vector<22x16xf32> to vector<8x16xf32>
    %2 = vector.extract_strided_slice %0 {offsets = [8, 0], sizes = [8, 16], strides = [1, 1]} : vector<22x16xf32> to vector<8x16xf32>
    %3 = vector.extract_strided_slice %0 {offsets = [16, 0], sizes = [6, 16], strides = [1, 1]} : vector<22x16xf32> to vector<6x16xf32>
    %4 = arith.mulf %2, %1 : vector<8x16xf32>
    %cst = arith.constant dense<0.000000e+00> : vector<8xf32>
    %5 = vector.multi_reduction <add>, %4, %cst [1] : vector<8x16xf32> to vector<8xf32>
    %6 = vector.shape_cast %5 : vector<8xf32> to vector<8x1xf32>
    %cst_1 = arith.constant dense<0xFF800000> : vector<6xf32>
    %7 = vector.multi_reduction <maximumf>, %3, %cst_1 [1] : vector<6x16xf32> to vector<6xf32>
    %8 = vector.shape_cast %7 : vector<6xf32> to vector<6x1xf32>
    %9 = tpu.transpose %6, [1, 0] : vector<8x1xf32> -> vector<1x8xf32>
    %cst_2 = arith.constant 1.000000e+00 : f32
    %10 = vector.broadcast %cst_2 : f32 to vector<1x8xf32>
    %11 = arith.subf %10, %9 : vector<1x8xf32>
    %12 = vector.broadcast %11 : vector<1x8xf32> to vector<6x8xf32>
    %13 = vector.broadcast %8 : vector<6x1xf32> to vector<6x8xf32>
    %14 = arith.addf %12, %13 : vector<6x8xf32>
    %cst_3 = arith.constant 0.000000e+00 : f32
    %15 = vector.broadcast %cst_3 : f32 to vector<6x8xf32>
    %16 = arith.maximumf %14, %15 : vector<6x8xf32>
    %17 = vector.shape_cast %16 : vector<6x8xf32> to vector<1x6x8xf32>
    %cst_4 = arith.constant dense<0.000000e+00> : vector<1xf32>
    %18 = vector.multi_reduction <add>, %17, %cst_4 [1, 2] : vector<1x6x8xf32> to vector<1xf32>
    %19 = vector.shape_cast %18 : vector<1xf32> to vector<1x1x1xf32>
    %20 = vector.extract %19[0, 0, 0] : f32 from vector<1x1x1xf32>
    %cst_5 = arith.constant 0.020833334 : f32
    %21 = arith.mulf %20, %cst_5 : f32
    %c0_6 = arith.constant 0 : index
    %c0_7 = arith.constant 0 : index
    %22 = memref.load %arg1[%c0_6, %c0_7] : memref<1x1xf32, #tpu.memory_space<smem>>
    memref.store %21, %arg1[%c0_6, %c0_7] : memref<1x1xf32, #tpu.memory_space<smem>>
    return
  }
}

</mosaic_0001>

<llo_original>
// kernel: _dro_loss_call.1
$region0: #{_dro_loss_call.1}
  #allocation0 [shape = 'u32[]', space=smem, size = 0x4, offset = 0x4, fixed_abs, tag = 'smem constant byte address 0x4 - core index']
  #allocation1 [shape = 'u32[144,128]{1,0:T(1,128)}', space=vmem, size = 0x12000, scoped, tag = 'internal scratch']
  %s0 = inlined_call_operand.vmem [shape: f32[22,16], index: 0, kind: input, shape index: {}]
  %s1 = inlined_call_operand.hbm [shape: f32[1,1], index: 1, kind: output, shape index: {}]
  %s2 = sld [smem:[#allocation0]]
  $region14: #{_dro_loss_call.1} parent=0
    _
  %s4 = ssub.s32 1, %s2
  %s5 = scalar_select 0, %s4, %s2
  $region1: #{_dro_loss_call.1} parent=0
    #allocation2 [shape = 'u8[512]{0}', space=smem, size = 0x200, scoped, tag = 'output window, operand 0, single buffered']
    #allocation3 [shape = 's32[1]{0}', space=sflag, size = 0x4, scoped, tag = 'scoped memory for _dro_loss_call.1']
    %6 = vsyncpa [#allocation3], 0
    // Predicated region
    $region2: #{_dro_loss_call.1} parent=1 // pred_check
      _
    $region3: #{_dro_loss_call.1} parent=1 // pred_check_branch
      %8 = sbr.rel (0) target = $region5
    $region4: #{_dro_loss_call.1} parent=1 // pred_region
      _
    $region5: #{_dro_loss_call.1} parent=1 // pred_fallthru
      _
    %v9 = vld [vmem:[%s0] sm:$0xff]
    %v10 = vld [vmem:[%s0 + $0x8] sm:$0xff]
    %v11 = vld [vmem:[%s0 + $0x10] sm:$0x3f]
    %v12 = vmul.f32 %v10, %v9
    %vm13 = vcmask 130048
    %v14 = vsel %vm13, %v12, 0.0
    %15 = vadd.xlane.f32.xlu0 %v14
    %v16 = vpop.xlane.xlu0 %15
    %vm17 = vcmask 128000
    %v18 = vsel %vm17, %v11, -inf
    %19 = vmax.xlane.f32.xlu0 %v18
    %v20 = vpop.xlane.xlu0 %19
    %21 = vxpose.xlu0.b32.start [1/16] %v16, 128
    %22 = vxpose.xlu0.b32.cont [2/16] 0.0, 128
    %23 = vxpose.xlu0.b32.cont [3/16] 0.0, 128
    %24 = vxpose.xlu0.b32.cont [4/16] 0.0, 128
    %25 = vxpose.xlu0.b32.cont [5/16] 0.0, 128
    %26 = vxpose.xlu0.b32.cont [6/16] 0.0, 128
    %27 = vxpose.xlu0.b32.cont [7/16] 0.0, 128
    %28 = vxpose.xlu0.b32.cont [8/16] 0.0, 128
    %29 = vxpose.xlu0.b32.cont [9/16] 0.0, 128
    %30 = vxpose.xlu0.b32.cont [10/16] 0.0, 128
    %31 = vxpose.xlu0.b32.cont [11/16] 0.0, 128
    %32 = vxpose.xlu0.b32.cont [12/16] 0.0, 128
    %33 = vxpose.xlu0.b32.cont [13/16] 0.0, 128
    %34 = vxpose.xlu0.b32.cont [14/16] 0.0, 128
    %35 = vxpose.xlu0.b32.cont [15/16] 0.0, 128
    %36 = vxpose.xlu0.b32.end [16/16] 0.0, 128
    %v37 = vpop.trf.xlu0
    %v38 = vpop.trf.xlu0
    %v39 = vpop.trf.xlu0
    %v40 = vpop.trf.xlu0
    %v41 = vpop.trf.xlu0
    %v42 = vpop.trf.xlu0
    %v43 = vpop.trf.xlu0
    %v44 = vpop.trf.xlu0
    %v45 = vpop.trf.xlu0
    %v46 = vpop.trf.xlu0
    %v47 = vpop.trf.xlu0
    %v48 = vpop.trf.xlu0
    %v49 = vpop.trf.xlu0
    %v50 = vpop.trf.xlu0
    %v51 = vpop.trf.xlu0
    %v52 = vpop.trf.xlu0
    %v53 = vsub.f32 1.0, %v37
    %v54 = vlaneseq
    %v55 = vshrl.u32 %v54, 7
    %v56 = vsub.s32 0, %v55
    %v57 = vrot.slane %v53, %v56
    %v58 = vadd.f32 %v57, %v20
    %v59 = vmax.f32 %v58, 0.0
    %vm60 = vcmask 62464
    %v61 = vsel %vm60, %v59, 0.0
    %62 = vadd.xlane.f32.xlu0 %v61
    %v63 = vpop.xlane.xlu0 %62
    %v64 = vrot.slane %v63, 4
    %v65 = vadd.f32 %v63, %v64
    %v66 = vrot.slane %v65, 2
    %v67 = vadd.f32 %v65, %v66
    %v68 = vrot.slane %v67, 1
    %v69 = vadd.f32 %v67, %v68
    %s70 = vtos %v69
    %s71 = smul.f32 %s70, 0.020833334
    %s72 = scalar_lea.smem [#allocation2], 0
    %73 = sst [smem:[%s72]] %s71
    // Predicated region
    $region6: #{_dro_loss_call.1} parent=1 // pred_check
      _
    $region7: #{_dro_loss_call.1} parent=1 // pred_check_branch
      %75 = sbr.rel (0) target = $region9
    $region8: #{_dro_loss_call.1} parent=1 // pred_region
      %s77 = ssub.s32 16, 16
      %78 = vsyncadd [#allocation3], %s77
      %81 = dma.smem_to_hbm [#allocation2], 16, %s1, [#allocation3]
    $region9: #{_dro_loss_call.1} parent=1 // pred_fallthru
      _
    // Predicated region
    $region10: #{_dro_loss_call.1} parent=1 // pred_check
      _
    $region11: #{_dro_loss_call.1} parent=1 // pred_check_branch
      %83 = sbr.rel (0) target = $region13
    $region12: #{_dro_loss_call.1} parent=1 // pred_region
      %84 = dma.done [#allocation3], 16
    $region13: #{_dro_loss_call.1} parent=1 // pred_fallthru
      _
    %85 = sfence
    %86 = vsyncpa [#allocation3], 1

</llo_original>
